<compile_context>
chip_gen: v5e
topology: v5e:2x2
jax: 0.10.0
libtpu: 0.0.40
codegen_flags: <defaults>
</compile_context>

<pallas_src>
import functools

import jax
import jax.numpy as jnp
from jax import lax
from jax.experimental import pallas as pl
from jax.experimental.pallas import tpu as pltpu


def _round_up(x, m):
    return (x + m - 1) // m * m


def actor_critic_kernel(x_ref, w1_ref, b1_ref, w2_ref, b2_ref, out_ref, *,
                        num_actions):
    # x_ref  : [TB, K]       matmul dtype (bf16/f32), streamed per grid step
    # w1_ref : [K,  HP]      fused critic|actor layer-1 weights (VMEM-resident)
    # b1_ref : [1,  HP]      f32 fused layer-1 biases        (VMEM-resident)
    # w2_ref : [HP, LANES]   block-diagonal layer-2 weights  (VMEM-resident)
    # b2_ref : [1,  LANES]   f32 fused layer-2 biases        (VMEM-resident)
    # out_ref: [TB, LANES]   f32: lane 0 = value, lanes 1..A = policy, rest 0

    # Layer 1 for BOTH heads: one MXU push, f32 accumulate; bias + relu on VPU.
    h = jnp.dot(x_ref[...], w1_ref[...], preferred_element_type=jnp.float32)
    h = jnp.maximum(h + b1_ref[...], 0.0)

    # Layer 2 (block-diagonal): one MXU push produces the critic value and the
    # actor logits side by side in a single lane-dense row.
    z = jnp.dot(h.astype(w2_ref.dtype), w2_ref[...],
                preferred_element_type=jnp.float32)
    z = z + b2_ref[...]

    # lane 0: raw value; lanes 1..A: sigmoid(logits); padding lanes: exact 0.
    lane = lax.broadcasted_iota(jnp.int32, z.shape, 1)
    out_ref[...] = jnp.where(
        lane == 0, z,
        jnp.where(lane <= num_actions, jax.nn.sigmoid(z), 0.0))


def pack_params(params, num_inputs, hidden_size, num_actions,
                matmul_dtype=jnp.bfloat16):
    """Pack the 8 Linear tensors into 2 weight slabs + 2 bias rows.

    w1 : [K, HP]        cols 0..H-1 = critic_linear1, cols H..2H-1 = actor_linear1
    b1 : [1, HP]        matching biases (f32)
    w2 : [HP, LANES]    rows 0..H-1 col 0 = critic_linear2, rows H..2H-1
                        cols 1..A = actor_linear2, everything else 0
    b2 : [1, LANES]     lane 0 = critic bias, lanes 1..A = actor bias (f32)
    """
    K, H, A = num_inputs, hidden_size, num_actions
    HP = _round_up(2 * H, 128)          # layer-1 output width, MXU-aligned
    LANES = _round_up(1 + A, 128)       # lane-dense output width
    assert 2 * H <= HP and 1 + A <= LANES

    w1 = jnp.zeros((K, HP), jnp.float32)
    w1 = w1.at[:, :H].set(params["w1c"])
    w1 = w1.at[:, H:2 * H].set(params["w1a"])

    b1 = jnp.zeros((1, HP), jnp.float32)
    b1 = b1.at[0, :H].set(params["b1c"][0])
    b1 = b1.at[0, H:2 * H].set(params["b1a"][0])

    w2 = jnp.zeros((HP, LANES), jnp.float32)
    w2 = w2.at[:H, 0].set(params["w2c"][:, 0])
    w2 = w2.at[H:2 * H, 1:1 + A].set(params["w2a"])

    b2 = jnp.zeros((1, LANES), jnp.float32)
    b2 = b2.at[0, 0].set(params["b2c"][0, 0])
    b2 = b2.at[0, 1:1 + A].set(params["b2a"][0])

    return dict(w1=w1.astype(matmul_dtype), b1=b1,
                w2=w2.astype(matmul_dtype), b2=b2)


def actor_critic_forward(state, packed, *, num_actions, block_b=256):
    """state: [B, num_inputs] f32.  Returns (value [B,1], policy [B,A]), f32."""
    B, K = state.shape
    w1, b1, w2, b2 = packed["w1"], packed["b1"], packed["w2"], packed["b2"]
    assert w1.shape[0] == K
    HP, LANES = w2.shape

    # Batch tile: stream TB rows per grid step; pad ragged batches to the tile.
    TB = min(block_b, _round_up(B, 8))
    Bp = _round_up(B, TB)

    x = state.astype(w1.dtype)          # bf16 halves the streamed DMA bytes
    if Bp != B:
        x = jnp.pad(x, ((0, Bp - B), (0, 0)))

    flops = 2 * Bp * (K * HP + HP * LANES)
    bytes_accessed = (x.size * x.dtype.itemsize
                      + w1.size * w1.dtype.itemsize
                      + b1.size * b1.dtype.itemsize
                      + w2.size * w2.dtype.itemsize
                      + b2.size * b2.dtype.itemsize
                      + Bp * LANES * 4)

    out = pl.pallas_call(
        functools.partial(actor_critic_kernel, num_actions=num_actions),
        out_shape=jax.ShapeDtypeStruct((Bp, LANES), jnp.float32),
        grid=(Bp // TB,),
        in_specs=[
            pl.BlockSpec((TB, K), lambda i: (i, 0)),       # x: streamed
            pl.BlockSpec((K, HP), lambda i: (0, 0)),       # w1: VMEM-resident
            pl.BlockSpec((1, HP), lambda i: (0, 0)),       # b1: VMEM-resident
            pl.BlockSpec((HP, LANES), lambda i: (0, 0)),   # w2: VMEM-resident
            pl.BlockSpec((1, LANES), lambda i: (0, 0)),    # b2: VMEM-resident
        ],
        out_specs=pl.BlockSpec((TB, LANES), lambda i: (i, 0)),
        compiler_params=pltpu.CompilerParams(
            dimension_semantics=("parallel",)),            # 2 TCs on v7x
        cost_estimate=pl.CostEstimate(flops=flops,
                                      transcendentals=Bp * LANES,
                                      bytes_accessed=bytes_accessed),
    )(x, w1, b1, w2, b2)

    value = out[:B, :1]
    policy = out[:B, 1:1 + num_actions]
    return value, policy


def init_params(key, num_inputs, num_actions, hidden_size):
    """Deterministic init mimicking nn.Linear's U(-1/sqrt(fan_in), 1/sqrt(fan_in)).

    Weights stored already transposed [in_features, out_features]; biases [1, out].
    """
    keys = jax.random.split(key, 8)

    def lin(kw, kb, fan_in, fan_out):
        bound = 1.0 / jnp.sqrt(jnp.float32(fan_in))
        w = jax.random.uniform(kw, (fan_in, fan_out), jnp.float32, -bound, bound)
        b = jax.random.uniform(kb, (1, fan_out), jnp.float32, -bound, bound)
        return w, b

    w1c, b1c = lin(keys[0], keys[1], num_inputs, hidden_size)
    w2c, b2c = lin(keys[2], keys[3], hidden_size, 1)
    w1a, b1a = lin(keys[4], keys[5], num_inputs, hidden_size)
    w2a, b2a = lin(keys[6], keys[7], hidden_size, num_actions)
    return dict(w1c=w1c, b1c=b1c, w2c=w2c, b2c=b2c,
                w1a=w1a, b1a=b1a, w2a=w2a, b2a=b2a)


def reference_forward(state, p, matmul_dtype=jnp.float32):
    """Pure-JAX reference on the original (unpacked) params."""
    def mm(a, b):
        return jnp.dot(a.astype(matmul_dtype), b.astype(matmul_dtype),
                       preferred_element_type=jnp.float32)
    h_c = jnp.maximum(mm(state, p["w1c"]) + p["b1c"], 0.0)
    value = mm(h_c, p["w2c"]) + p["b2c"]
    h_a = jnp.maximum(mm(state, p["w1a"]) + p["b1a"], 0.0)
    policy = jax.nn.sigmoid(mm(h_a, p["w2a"]) + p["b2a"])
    return value, policy


if __name__ == "__main__":
    num_inputs = 8
    num_actions = 4
    hidden_size = 32

    key = jax.random.PRNGKey(0)
    k_state, k_params, k_state2 = jax.random.split(key, 3)

    params = init_params(k_params, num_inputs, num_actions, hidden_size)
    packed = pack_params(params, num_inputs, hidden_size, num_actions,
                         matmul_dtype=jnp.bfloat16)

    # --- Batched case: grid of 4 tiles of 256 rows, weights stay in VMEM. ---
    B = 1024
    state = jax.random.normal(k_state, (B, num_inputs), dtype=jnp.float32)
    value, policy = actor_critic_forward(state, packed,
                                         num_actions=num_actions, block_b=256)
    value = jax.block_until_ready(value)
    policy = jax.block_until_ready(policy)
    assert value.shape == (B, 1) and policy.shape == (B, num_actions)

    v_ref_bf, p_ref_bf = reference_forward(state, params, jnp.bfloat16)
    v_ref_f32, p_ref_f32 = reference_forward(state, params, jnp.float32)
    assert jnp.allclose(value, v_ref_bf, atol=2e-3, rtol=2e-3)
    assert jnp.allclose(policy, p_ref_bf, atol=2e-3, rtol=2e-3)
    assert jnp.allclose(value, v_ref_f32, atol=3e-2, rtol=3e-2)
    assert jnp.allclose(policy, p_ref_f32, atol=3e-2, rtol=3e-2)

    # --- Tiny / ragged batch (the PyTorch module's single-state forward). ---
    # TODO(synk): for true single-env RL stepping, fuse many timesteps/envs into
    # one kernel invocation (weights held in VMEM) instead of launching per state.
    state2 = jax.random.normal(k_state2, (2, num_inputs), dtype=jnp.float32)
    v_small, p_small = actor_critic_forward(state2, packed,
                                            num_actions=num_actions)
    v_small = jax.block_until_ready(v_small)
    p_small = jax.block_until_ready(p_small)
    v2_ref, p2_ref = reference_forward(state2, params, jnp.bfloat16)
    assert v_small.shape == (2, 1) and p_small.shape == (2, num_actions)
    assert jnp.allclose(v_small, v2_ref, atol=2e-3, rtol=2e-3)
    assert jnp.allclose(p_small, p2_ref, atol=2e-3, rtol=2e-3)

    print("KERNEL_OK")
</pallas_src>

<mosaic_0001>
module attributes {stable_mosaic.version = 11 : i64} {
  func.func @actor_critic_kernel(%arg0: i32, %arg1: memref<256x8xbf16, #tpu.memory_space<vmem>>, %arg2: memref<8x128xbf16, #tpu.memory_space<vmem>>, %arg3: memref<1x128xf32, #tpu.memory_space<vmem>>, %arg4: memref<128x128xbf16, #tpu.memory_space<vmem>>, %arg5: memref<1x128xf32, #tpu.memory_space<vmem>>, %arg6: memref<256x128xf32, #tpu.memory_space<vmem>>) attributes {dimension_semantics = [#tpu.dimension_semantics<parallel>], iteration_bounds = array<i64: 4>, scalar_prefetch = 0 : i64, scratch_operands = 0 : i64, tpu.core_type = #tpu.core_type<tc>, window_params = [{transform_indices = @transform_0, window_bounds = array<i64: 256, 8>}, {pipeline_mode = #tpu.pipeline_mode<synchronous>, transform_indices = @transform_1, window_bounds = array<i64: 8, 128>}, {pipeline_mode = #tpu.pipeline_mode<synchronous>, transform_indices = @transform_2, window_bounds = array<i64: 1, 128>}, {pipeline_mode = #tpu.pipeline_mode<synchronous>, transform_indices = @transform_3, window_bounds = array<i64: 128, 128>}, {pipeline_mode = #tpu.pipeline_mode<synchronous>, transform_indices = @transform_4, window_bounds = array<i64: 1, 128>}, {transform_indices = @transform_5, window_bounds = array<i64: 256, 128>}]} {
    %c0 = arith.constant 0 : index
    %c0_0 = arith.constant 0 : index
    %0 = vector.load %arg1[%c0, %c0_0] : memref<256x8xbf16, #tpu.memory_space<vmem>>, vector<256x8xbf16>
    %c0_1 = arith.constant 0 : index
    %c0_2 = arith.constant 0 : index
    %1 = vector.load %arg2[%c0_1, %c0_2] : memref<8x128xbf16, #tpu.memory_space<vmem>>, vector<8x128xbf16>
    %cst = arith.constant dense<0.000000e+00> : vector<256x128xf32>
    %2 = tpu.matmul %0, %1, %cst {dimension_numbers = #tpu.dot_dimension_numbers<[1], [0], [0], [1], [0, 0, 1, 1], [], []>} : vector<256x8xbf16>, vector<8x128xbf16>, vector<256x128xf32> -> vector<256x128xf32>
    %c0_3 = arith.constant 0 : index
    %c0_4 = arith.constant 0 : index
    %3 = vector.load %arg3[%c0_3, %c0_4] : memref<1x128xf32, #tpu.memory_space<vmem>>, vector<1x128xf32>
    %4 = vector.broadcast %3 : vector<1x128xf32> to vector<256x128xf32>
    %5 = arith.addf %2, %4 : vector<256x128xf32>
    %cst_5 = arith.constant 0.000000e+00 : f32
    %6 = vector.broadcast %cst_5 : f32 to vector<256x128xf32>
    %7 = arith.maximumf %5, %6 : vector<256x128xf32>
    %8 = arith.truncf %7 : vector<256x128xf32> to vector<256x128xbf16>
    %c0_6 = arith.constant 0 : index
    %c0_7 = arith.constant 0 : index
    %9 = vector.load %arg4[%c0_6, %c0_7] : memref<128x128xbf16, #tpu.memory_space<vmem>>, vector<128x128xbf16>
    %cst_8 = arith.constant dense<0.000000e+00> : vector<256x128xf32>
    %10 = tpu.matmul %8, %9, %cst_8 {dimension_numbers = #tpu.dot_dimension_numbers<[1], [0], [0], [1], [0, 0, 1, 1], [], []>} : vector<256x128xbf16>, vector<128x128xbf16>, vector<256x128xf32> -> vector<256x128xf32>
    %c0_9 = arith.constant 0 : index
    %c0_10 = arith.constant 0 : index
    %11 = vector.load %arg5[%c0_9, %c0_10] : memref<1x128xf32, #tpu.memory_space<vmem>>, vector<1x128xf32>
    %12 = vector.broadcast %11 : vector<1x128xf32> to vector<256x128xf32>
    %13 = arith.addf %10, %12 : vector<256x128xf32>
    %14 = tpu.iota {dimensions = array<i32: 1>} : vector<256x128xi32>
    %c0_i32 = arith.constant 0 : i32
    %15 = vector.broadcast %c0_i32 : i32 to vector<256x128xi32>
    %16 = arith.cmpi eq, %14, %15 : vector<256x128xi32>
    %c4_i32 = arith.constant 4 : i32
    %17 = vector.broadcast %c4_i32 : i32 to vector<256x128xi32>
    %18 = arith.cmpi sle, %14, %17 : vector<256x128xi32>
    %19 = arith.negf %13 : vector<256x128xf32>
    %20 = math.exp %19 : vector<256x128xf32>
    %cst_11 = arith.constant 1.000000e+00 : f32
    %21 = vector.broadcast %cst_11 : f32 to vector<256x128xf32>
    %22 = arith.addf %21, %20 : vector<256x128xf32>
    %23 = arith.divf %21, %22 : vector<256x128xf32>
    %cst_12 = arith.constant 0.000000e+00 : f32
    %24 = vector.broadcast %cst_12 : f32 to vector<256x128xf32>
    %25 = arith.select %18, %23, %24 : vector<256x128xi1>, vector<256x128xf32>
    %26 = arith.select %16, %13, %25 : vector<256x128xi1>, vector<256x128xf32>
    %c0_13 = arith.constant 0 : index
    %c0_14 = arith.constant 0 : index
    %27 = vector.load %arg6[%c0_13, %c0_14] : memref<256x128xf32, #tpu.memory_space<vmem>>, vector<256x128xf32>
    tpu.vector_store %arg6[%c0_13, %c0_14], %26 {strides = array<i32>} : memref<256x128xf32, #tpu.memory_space<vmem>>, vector<256x128xf32>,
    return
  }
  func.func @transform_0(%arg0: i32) -> (i32, i32) {
    %c0_i32 = arith.constant 0 : i32
    %c0_i32_0 = arith.constant 0 : i32
    return %arg0, %c0_i32 : i32, i32
  }
  func.func @transform_1(%arg0: i32) -> (i32, i32) {
    %c0_i32 = arith.constant 0 : i32
    %c0_i32_0 = arith.constant 0 : i32
    %c0_i32_1 = arith.constant 0 : i32
    return %c0_i32, %c0_i32_0 : i32, i32
  }
  func.func @transform_2(%arg0: i32) -> (i32, i32) {
    %c0_i32 = arith.constant 0 : i32
    %c0_i32_0 = arith.constant 0 : i32
    %c0_i32_1 = arith.constant 0 : i32
    return %c0_i32, %c0_i32_0 : i32, i32
  }
  func.func @transform_3(%arg0: i32) -> (i32, i32) {
    %c0_i32 = arith.constant 0 : i32
    %c0_i32_0 = arith.constant 0 : i32
    %c0_i32_1 = arith.constant 0 : i32
    return %c0_i32, %c0_i32_0 : i32, i32
  }
  func.func @transform_4(%arg0: i32) -> (i32, i32) {
    %c0_i32 = arith.constant 0 : i32
    %c0_i32_0 = arith.constant 0 : i32
    %c0_i32_1 = arith.constant 0 : i32
    return %c0_i32, %c0_i32_0 : i32, i32
  }
  func.func @transform_5(%arg0: i32) -> (i32, i32) {
    %c0_i32 = arith.constant 0 : i32
    %c0_i32_0 = arith.constant 0 : i32
    return %arg0, %c0_i32 : i32, i32
  }
}

</mosaic_0001>

<llo_original>
// kernel: tpu_custom_call.1
$region0: #{tpu_custom_call.1}
  #allocation0 [shape = 'u32[]', space=smem, size = 0x4, offset = 0x4, fixed_abs, tag = 'smem constant byte address 0x4 - core index']
  #allocation1 [shape = 'u32[72,128]{1,0:T(1,128)}', space=vmem, size = 0x9000, scoped, tag = 'internal scratch']
  %s0 = inlined_call_operand.vmem [shape: bf16[1024,8], index: 0, kind: input, shape index: {}]
  %s1 = inlined_call_operand.vmem [shape: bf16[8,128], index: 1, kind: input, shape index: {}]
  %s2 = inlined_call_operand.vmem [shape: f32[1,128], index: 2, kind: input, shape index: {}]
  %s3 = inlined_call_operand.vmem [shape: bf16[128,128], index: 3, kind: input, shape index: {}]
  %s4 = inlined_call_operand.vmem [shape: f32[1,128], index: 4, kind: input, shape index: {}]
  %s5 = inlined_call_operand.hbm [shape: f32[1024,128], index: 5, kind: output, shape index: {}]
  %s6 = sld [smem:[#allocation0]]
  $region53: #{tpu_custom_call.1} parent=0
    _
  %s8 = ssub.s32 1, %s6
  %s9 = scalar_select 0, %s8, %s6
  $region1: #{tpu_custom_call.1} parent=0
    #allocation2 [shape = 'u8[262144]{0}', space=vmem, size = 0x40000, scoped, tag = 'output window, operand 0']
    #allocation3 [shape = 's32[2]{0}', space=sflag, size = 0x8, scoped, tag = 'scoped memory for tpu_custom_call.1']
    %10 = vsyncpa [#allocation3], 0
    %s11 = scalar_lea.sflag [#allocation3], 1
    %12 = vsyncpa %s11, 0
    loop: start=0, step=1, limit=6
    $region2: #{tpu_custom_call.1} parent=1 // loop_pre_header
      _
    $region3: #{tpu_custom_call.1} parent=1 // loop_header
      %s14 = sphi 0, %s18
      %p15 = scmp.ge.s32.totalorder %s14, 6
      %s24 = sphi 0, %s26
      %s27 = sphi 0, %s24
      %s28 = sphi 0, %s27
      %s44 = sphi 0, %s28
      %s48 = sphi 0, %s48
      %s50 = sphi 0, %s48
      %s51 = sphi 0, %s50
      %s65 = sphi 0, %s51
      %s69 = sphi 0, %s69
      %s71 = sphi 0, %s69
      %s72 = sphi 0, %s71
      %s86 = sphi 0, %s72
      %s90 = sphi 0, %s90
      %s92 = sphi 0, %s90
      %s93 = sphi 0, %s92
      %s107 = sphi 0, %s93
      %s111 = sphi 0, %s111
      %s113 = sphi 0, %s111
      %s114 = sphi 0, %s113
      %s128 = sphi 0, %s114
      %s134 = sphi 0, %s136
      %s137 = sphi 0, %s134
      %s138 = sphi 0, %s137
      %s154 = sphi 0, %s138
    $region4: #{tpu_custom_call.1} parent=1 // loop_header_branch
      %17 = sbr.rel (%p15) target = $region8
    $region5: #{tpu_custom_call.1} parent=1 // loop_body
      %s19 = ssub.s32 %s14, 1
      %s20 = ssub.s32 %s14, 2
      %s21 = sadd.s32 %s14, 1
      %s22 = ssub.s32 %s14, %s21
      %p23 = scmp.eq.s32.totalorder %s22, 0
      %s25 = sadd.s32 %s24, 1
      %s26 = scalar_select %p23, %s24, %s25
      %p29 = pneg %p23
      %p30 = scmp.eq.s32.totalorder %s14, 3
      %p31 = por %p29, %p30
      %p32 = scmp.ne.s32.totalorder %s24, %s27
      %p33 = scmp.eq.s32.totalorder %s14, 0
      %p34 = por %p32, %p33
      %p35 = scmp.ne.s32.totalorder %s24, %s27
      %p36 = scmp.eq.s32.totalorder %s19, 3
      %p37 = por %p35, %p36
      %p38 = scmp.ne.s32.totalorder %s27, %s28
      %p39 = scmp.eq.s32.totalorder %s19, 0
      %p40 = por %p38, %p39
      %p41 = scmp.ne.s32.totalorder %s27, %s28
      %p42 = scmp.eq.s32.totalorder %s20, 3
      %p43 = por %p41, %p42
      %p45 = scmp.ne.s32.totalorder %s28, %s44
      %p46 = scmp.eq.s32.totalorder %s20, 0
      %p47 = por %p45, %p46
      %s49 = sadd.s32 %s48, 1
      %p52 = scmp.eq.s32.totalorder %s14, 3
      %p53 = scmp.ne.s32.totalorder %s48, %s50
      %p54 = scmp.eq.s32.totalorder %s14, 0
      %p55 = por %p53, %p54
      %p56 = scmp.ne.s32.totalorder %s48, %s50
      %p57 = scmp.eq.s32.totalorder %s19, 3
      %p58 = por %p56, %p57
      %p59 = scmp.ne.s32.totalorder %s50, %s51
      %p60 = scmp.eq.s32.totalorder %s19, 0
      %p61 = por %p59, %p60
      %p62 = scmp.ne.s32.totalorder %s50, %s51
      %p63 = scmp.eq.s32.totalorder %s20, 3
      %p64 = por %p62, %p63
      %p66 = scmp.ne.s32.totalorder %s51, %s65
      %p67 = scmp.eq.s32.totalorder %s20, 0
      %p68 = por %p66, %p67
      %s70 = sadd.s32 %s69, 1
      %p73 = scmp.eq.s32.totalorder %s14, 3
      %p74 = scmp.ne.s32.totalorder %s69, %s71
      %p75 = scmp.eq.s32.totalorder %s14, 0
      %p76 = por %p74, %p75
      %p77 = scmp.ne.s32.totalorder %s69, %s71
      %p78 = scmp.eq.s32.totalorder %s19, 3
      %p79 = por %p77, %p78
      %p80 = scmp.ne.s32.totalorder %s71, %s72
      %p81 = scmp.eq.s32.totalorder %s19, 0
      %p82 = por %p80, %p81
      %p83 = scmp.ne.s32.totalorder %s71, %s72
      %p84 = scmp.eq.s32.totalorder %s20, 3
      %p85 = por %p83, %p84
      %p87 = scmp.ne.s32.totalorder %s72, %s86
      %p88 = scmp.eq.s32.totalorder %s20, 0
      %p89 = por %p87, %p88
      %s91 = sadd.s32 %s90, 1
      %p94 = scmp.eq.s32.totalorder %s14, 3
      %p95 = scmp.ne.s32.totalorder %s90, %s92
      %p96 = scmp.eq.s32.totalorder %s14, 0
      %p97 = por %p95, %p96
      %p98 = scmp.ne.s32.totalorder %s90, %s92
      %p99 = scmp.eq.s32.totalorder %s19, 3
      %p100 = por %p98, %p99
      %p101 = scmp.ne.s32.totalorder %s92, %s93
      %p102 = scmp.eq.s32.totalorder %s19, 0
      %p103 = por %p101, %p102
      %p104 = scmp.ne.s32.totalorder %s92, %s93
      %p105 = scmp.eq.s32.totalorder %s20, 3
      %p106 = por %p104, %p105
      %p108 = scmp.ne.s32.totalorder %s93, %s107
      %p109 = scmp.eq.s32.totalorder %s20, 0
      %p110 = por %p108, %p109
      %s112 = sadd.s32 %s111, 1
      %p115 = scmp.eq.s32.totalorder %s14, 3
      %p116 = scmp.ne.s32.totalorder %s111, %s113
      %p117 = scmp.eq.s32.totalorder %s14, 0
      %p118 = por %p116, %p117
      %p119 = scmp.ne.s32.totalorder %s111, %s113
      %p120 = scmp.eq.s32.totalorder %s19, 3
      %p121 = por %p119, %p120
      %p122 = scmp.ne.s32.totalorder %s113, %s114
      %p123 = scmp.eq.s32.totalorder %s19, 0
      %p124 = por %p122, %p123
      %p125 = scmp.ne.s32.totalorder %s113, %s114
      %p126 = scmp.eq.s32.totalorder %s20, 3
      %p127 = por %p125, %p126
      %p129 = scmp.ne.s32.totalorder %s114, %s128
      %p130 = scmp.eq.s32.totalorder %s20, 0
      %p131 = por %p129, %p130
      %s132 = ssub.s32 %s14, %s21
      %p133 = scmp.eq.s32.totalorder %s132, 0
      %s135 = sadd.s32 %s134, 1
      %s136 = scalar_select %p133, %s134, %s135
      %p139 = pneg %p133
      %p140 = scmp.eq.s32.totalorder %s14, 3
      %p141 = por %p139, %p140
      %p142 = scmp.ne.s32.totalorder %s134, %s137
      %p143 = scmp.eq.s32.totalorder %s14, 0
      %p144 = por %p142, %p143
      %p145 = scmp.ne.s32.totalorder %s134, %s137
      %p146 = scmp.eq.s32.totalorder %s19, 3
      %p147 = por %p145, %p146
      %p148 = scmp.ne.s32.totalorder %s137, %s138
      %p149 = scmp.eq.s32.totalorder %s19, 0
      %p150 = por %p148, %p149
      %p151 = scmp.ne.s32.totalorder %s137, %s138
      %p152 = scmp.eq.s32.totalorder %s20, 3
      %p153 = por %p151, %p152
      %p155 = scmp.ne.s32.totalorder %s138, %s154
      %p156 = scmp.eq.s32.totalorder %s20, 0
      %p157 = por %p155, %p156
      %p158 = scmp.le.s32.totalorder 1, %s14
      %p159 = scmp.lt.s32.totalorder %s14, 5
      %p160 = pnand %p158, %p159
      %p161 = pneg %p160
      // Predicated region
      $region9: #{tpu_custom_call.1} parent=5 // pred_check
        _
      $region10: #{tpu_custom_call.1} parent=5 // pred_check_branch
        %163 = sbr.rel (%p160) target = $region12
      $region11: #{tpu_custom_call.1} parent=5 // pred_region
        %s164 = ssub.s32 %s14, 1
        // Predicated region
        $region13: #{tpu_custom_call.1} parent=11 // pred_check
          %p165 = pneg %p61
        $region14: #{tpu_custom_call.1} parent=11 // pred_check_branch
          %167 = sbr.rel (%p165) target = $region16
        $region15: #{tpu_custom_call.1} parent=11 // pred_region
          _
        $region16: #{tpu_custom_call.1} parent=11 // pred_fallthru
          _
        // Predicated region
        $region17: #{tpu_custom_call.1} parent=11 // pred_check
          %p168 = pneg %p82
        $region18: #{tpu_custom_call.1} parent=11 // pred_check_branch
          %170 = sbr.rel (%p168) target = $region20
        $region19: #{tpu_custom_call.1} parent=11 // pred_region
          _
        $region20: #{tpu_custom_call.1} parent=11 // pred_fallthru
          _
        // Predicated region
        $region21: #{tpu_custom_call.1} parent=11 // pred_check
          %p171 = pneg %p103
        $region22: #{tpu_custom_call.1} parent=11 // pred_check_branch
          %173 = sbr.rel (%p171) target = $region24
        $region23: #{tpu_custom_call.1} parent=11 // pred_region
          _
        $region24: #{tpu_custom_call.1} parent=11 // pred_fallthru
          _
        // Predicated region
        $region25: #{tpu_custom_call.1} parent=11 // pred_check
          %p174 = pneg %p124
        $region26: #{tpu_custom_call.1} parent=11 // pred_check_branch
          %176 = sbr.rel (%p174) target = $region28
        $region27: #{tpu_custom_call.1} parent=11 // pred_region
          _
        $region28: #{tpu_custom_call.1} parent=11 // pred_fallthru
          _
      $region12: #{tpu_custom_call.1} parent=5 // pred_fallthru
        _
      %p177 = scmp.lt.s32.totalorder %s14, 4
      // Predicated region
      $region29: #{tpu_custom_call.1} parent=5 // pred_check
        %p178 = pneg %p177
      $region30: #{tpu_custom_call.1} parent=5 // pred_check_branch
        %180 = sbr.rel (%p178) target = $region32
      $region31: #{tpu_custom_call.1} parent=5 // pred_region
        // Predicated region
        $region33: #{tpu_custom_call.1} parent=31 // pred_check
          %p181 = pneg %p34
        $region34: #{tpu_custom_call.1} parent=31 // pred_check_branch
          %183 = sbr.rel (%p181) target = $region36
        $region35: #{tpu_custom_call.1} parent=31 // pred_region
          %s184 = smul.u32 32, %s14
          %p185 = scmp.lt.s32.totalorder %s184, 127
          %s186 = scalar_select %p185, %s184, 127
          %s187 = smul.addr %s186, 4
          %s188 = scalar_lea.vmem %s0, %s187
          %s189 = smul.u32 32, %s14
        $region36: #{tpu_custom_call.1} parent=31 // pred_fallthru
          _
      $region32: #{tpu_custom_call.1} parent=5 // pred_fallthru
        _
      %p190 = scmp.le.s32.totalorder 1, %s14
      %p191 = scmp.lt.s32.totalorder %s14, 5
      %p192 = pnand %p190, %p191
      %p193 = pneg %p192
      // Predicated region
      $region37: #{tpu_custom_call.1} parent=5 // pred_check
        _
      $region38: #{tpu_custom_call.1} parent=5 // pred_check_branch
        %195 = sbr.rel (%p192) target = $region40
      $region39: #{tpu_custom_call.1} parent=5 // pred_region
        %s196 = ssub.s32 %s14, 1
        %s197 = smul.u32 32, %s19
        %p198 = scmp.lt.s32.totalorder %s197, 127
        %s199 = scalar_select %p198, %s197, 127
        %s200 = smul.addr %s199, 4
        %s201 = scalar_lea.vmem %s0, %s200
        %p202 = pneg %p40
        %p203 = pneg %p37
        %p204 = pneg %p61
        %p205 = pneg %p58
        %p206 = pneg %p82
        %p207 = pneg %p79
        %p208 = pneg %p103
        %p209 = pneg %p100
        %p210 = pneg %p124
        %p211 = pneg %p121
        %p212 = pneg %p150
        %p213 = pneg %p147
        %s214 = sand.u32 %s137, 1
        %s215 = scalar_lea.sflag [#allocation3], %s214
        %s216 = sand.u32 %s137, 1
        %s217 = smul.addr %s216, 256
        %s218 = scalar_lea.vmem [#allocation2], %s217
        %s219 = smul.u32 32, %s19
        %p220 = scmp.lt.s32.totalorder %s219, 127
        %s221 = scalar_select %p220, %s219, 127
        %s222 = smul.addr %s221, 4
        %s223 = scalar_lea.vmem %s0, %s222
        %s224 = smul.u32 32, %s19
        %s225 = smul.u32 32, %s19
        %v227 = vld [vmem:[%s223] sm:$0xf]
        %v228 = vld [vmem:[%s223 + $0x4] sm:$0xf]
        %v229 = vld [vmem:[%s223 + $0x8] sm:$0xf]
        %v230 = vld [vmem:[%s223 + $0xc] sm:$0xf]
        %v231 = vld [vmem:[%s223 + $0x10] sm:$0xf]
        %v232 = vld [vmem:[%s223 + $0x14] sm:$0xf]
        %v233 = vld [vmem:[%s223 + $0x18] sm:$0xf]
        %v234 = vld [vmem:[%s223 + $0x1c] sm:$0xf]
        %v235 = vld [vmem:[%s223 + $0x20] sm:$0xf]
        %v236 = vld [vmem:[%s223 + $0x24] sm:$0xf]
        %v237 = vld [vmem:[%s223 + $0x28] sm:$0xf]
        %v238 = vld [vmem:[%s223 + $0x2c] sm:$0xf]
        %v239 = vld [vmem:[%s223 + $0x30] sm:$0xf]
        %v240 = vld [vmem:[%s223 + $0x34] sm:$0xf]
        %v241 = vld [vmem:[%s223 + $0x38] sm:$0xf]
        %v242 = vld [vmem:[%s223 + $0x3c] sm:$0xf]
        %v243 = vld [vmem:[%s223 + $0x40] sm:$0xf]
        %v244 = vld [vmem:[%s223 + $0x44] sm:$0xf]
        %v245 = vld [vmem:[%s223 + $0x48] sm:$0xf]
        %v246 = vld [vmem:[%s223 + $0x4c] sm:$0xf]
        %v247 = vld [vmem:[%s223 + $0x50] sm:$0xf]
        %v248 = vld [vmem:[%s223 + $0x54] sm:$0xf]
        %v249 = vld [vmem:[%s223 + $0x58] sm:$0xf]
        %v250 = vld [vmem:[%s223 + $0x5c] sm:$0xf]
        %v251 = vld [vmem:[%s223 + $0x60] sm:$0xf]
        %v252 = vld [vmem:[%s223 + $0x64] sm:$0xf]
        %v253 = vld [vmem:[%s223 + $0x68] sm:$0xf]
        %v254 = vld [vmem:[%s223 + $0x6c] sm:$0xf]
        %v255 = vld [vmem:[%s223 + $0x70] sm:$0xf]
        %v256 = vld [vmem:[%s223 + $0x74] sm:$0xf]
        %v257 = vld [vmem:[%s223 + $0x78] sm:$0xf]
        %v258 = vld [vmem:[%s223 + $0x7c] sm:$0xf]
        %v259 = vld [vmem:[%s1] sm:$0xf]
        %v260 = vld [vmem:[%s2] sm:$0x1]
        %v262 = vperm.slane %v260, 0
        %v296 = vunpack.c.l.b16 %v227
        %v297 = vunpack.c.l.b16 %v228
        %v298 = vunpack.c.l.b16 %v229
        %v299 = vunpack.c.l.b16 %v230
        %v300 = vunpack.c.l.b16 %v231
        %v301 = vunpack.c.l.b16 %v232
        %v302 = vunpack.c.l.b16 %v233
        %v303 = vunpack.c.l.b16 %v234
        %v304 = vunpack.c.l.b16 %v235
        %v305 = vunpack.c.l.b16 %v236
        %v306 = vunpack.c.l.b16 %v237
        %v307 = vunpack.c.l.b16 %v238
        %v308 = vunpack.c.l.b16 %v239
        %v309 = vunpack.c.l.b16 %v240
        %v310 = vunpack.c.l.b16 %v241
        %v311 = vunpack.c.l.b16 %v242
        %v312 = vunpack.c.l.b16 %v243
        %v313 = vunpack.c.l.b16 %v244
        %v314 = vunpack.c.l.b16 %v245
        %v315 = vunpack.c.l.b16 %v246
        %v316 = vunpack.c.l.b16 %v247
        %v317 = vunpack.c.l.b16 %v248
        %v318 = vunpack.c.l.b16 %v249
        %v319 = vunpack.c.l.b16 %v250
        %v320 = vunpack.c.l.b16 %v251
        %v321 = vunpack.c.l.b16 %v252
        %v322 = vunpack.c.l.b16 %v253
        %v323 = vunpack.c.l.b16 %v254
        %v324 = vunpack.c.l.b16 %v255
        %v325 = vunpack.c.l.b16 %v256
        %v326 = vunpack.c.l.b16 %v257
        %v327 = vunpack.c.l.b16 %v258
        %v328 = vpack.c.b16 %v297, %v296
        %v329 = vpack.c.b16 %v299, %v298
        %v330 = vpack.c.b16 %v301, %v300
        %v331 = vpack.c.b16 %v303, %v302
        %v332 = vpack.c.b16 %v305, %v304
        %v333 = vpack.c.b16 %v307, %v306
        %v334 = vpack.c.b16 %v309, %v308
        %v335 = vpack.c.b16 %v311, %v310
        %v336 = vpack.c.b16 %v313, %v312
        %v337 = vpack.c.b16 %v315, %v314
        %v338 = vpack.c.b16 %v317, %v316
        %v339 = vpack.c.b16 %v319, %v318
        %v340 = vpack.c.b16 %v321, %v320
        %v341 = vpack.c.b16 %v323, %v322
        %v342 = vpack.c.b16 %v325, %v324
        %v343 = vpack.c.b16 %v327, %v326
        %vm344 = vcmask 64512
        %v346 = vsel %vm344, %v328, 0
        %v349 = vsel %vm344, %v329, 0
        %v352 = vsel %vm344, %v330, 0
        %v355 = vsel %vm344, %v331, 0
        %v358 = vsel %vm344, %v332, 0
        %v361 = vsel %vm344, %v333, 0
        %v364 = vsel %vm344, %v334, 0
        %v367 = vsel %vm344, %v335, 0
        %v370 = vsel %vm344, %v336, 0
        %v373 = vsel %vm344, %v337, 0
        %v376 = vsel %vm344, %v338, 0
        %v379 = vsel %vm344, %v339, 0
        %v382 = vsel %vm344, %v340, 0
        %v385 = vsel %vm344, %v341, 0
        %v388 = vsel %vm344, %v342, 0
        %v391 = vsel %vm344, %v343, 0
        %vm393 = vcmask 1043456
        %v395 = vsel %vm393, %v259, 0
        %397 = vmatpush.bf16.msra.mxu0 0
        %398 = vmatpush.bf16.msra.mxu0 0
        %399 = vmatpush.bf16.msra.mxu0 0
        %400 = vmatpush.bf16.msra.mxu0 0
        %401 = vmatpush.bf16.msra.mxu0 0
        %402 = vmatpush.bf16.msra.mxu0 0
        %403 = vmatpush.bf16.msra.mxu0 0
        %404 = vmatpush.bf16.msra.mxu0 %v395
        %405 = vmatmul.bf16.gmra.mxu0 %v346
        %v406 = vpop.f32.mrf.mxu0
        %v407 = vadd.f32 %v262, %v406
        %v408 = vpop.f32.mrf.mxu0
        %v409 = vadd.f32 %v262, %v408
        %410 = vmatmul.bf16.gmra.mxu0 %v349
        %v411 = vpop.f32.mrf.mxu0
        %v412 = vadd.f32 %v262, %v411
        %v413 = vpop.f32.mrf.mxu0
        %v414 = vadd.f32 %v262, %v413
        %415 = vmatmul.bf16.gmra.mxu0 %v352
        %v416 = vpop.f32.mrf.mxu0
        %v417 = vadd.f32 %v262, %v416
        %v418 = vpop.f32.mrf.mxu0
        %v419 = vadd.f32 %v262, %v418
        %420 = vmatmul.bf16.gmra.mxu0 %v355
        %v421 = vpop.f32.mrf.mxu0
        %v422 = vadd.f32 %v262, %v421
        %v423 = vpop.f32.mrf.mxu0
        %v424 = vadd.f32 %v262, %v423
        %425 = vmatmul.bf16.gmra.mxu0 %v358
        %v426 = vpop.f32.mrf.mxu0
        %v427 = vadd.f32 %v262, %v426
        %v428 = vpop.f32.mrf.mxu0
        %v429 = vadd.f32 %v262, %v428
        %430 = vmatmul.bf16.gmra.mxu0 %v361
        %v431 = vpop.f32.mrf.mxu0
        %v432 = vadd.f32 %v262, %v431
        %v433 = vpop.f32.mrf.mxu0
        %v434 = vadd.f32 %v262, %v433
        %435 = vmatmul.bf16.gmra.mxu0 %v364
        %v436 = vpop.f32.mrf.mxu0
        %v437 = vadd.f32 %v262, %v436
        %v438 = vpop.f32.mrf.mxu0
        %v439 = vadd.f32 %v262, %v438
        %440 = vmatmul.bf16.gmra.mxu0 %v367
        %v441 = vpop.f32.mrf.mxu0
        %v442 = vadd.f32 %v262, %v441
        %v443 = vpop.f32.mrf.mxu0
        %v444 = vadd.f32 %v262, %v443
        %445 = vmatmul.bf16.gmra.mxu0 %v370
        %v446 = vpop.f32.mrf.mxu0
        %v447 = vadd.f32 %v262, %v446
        %v448 = vpop.f32.mrf.mxu0
        %v449 = vadd.f32 %v262, %v448
        %450 = vmatmul.bf16.gmra.mxu0 %v373
        %v451 = vpop.f32.mrf.mxu0
        %v452 = vadd.f32 %v262, %v451
        %v453 = vpop.f32.mrf.mxu0
        %v454 = vadd.f32 %v262, %v453
        %455 = vmatmul.bf16.gmra.mxu0 %v376
        %v456 = vpop.f32.mrf.mxu0
        %v457 = vadd.f32 %v262, %v456
        %v458 = vpop.f32.mrf.mxu0
        %v459 = vadd.f32 %v262, %v458
        %460 = vmatmul.bf16.gmra.mxu0 %v379
        %v461 = vpop.f32.mrf.mxu0
        %v462 = vadd.f32 %v262, %v461
        %v463 = vpop.f32.mrf.mxu0
        %v464 = vadd.f32 %v262, %v463
        %465 = vmatmul.bf16.gmra.mxu0 %v382
        %v466 = vpop.f32.mrf.mxu0
        %v467 = vadd.f32 %v262, %v466
        %v468 = vpop.f32.mrf.mxu0
        %v469 = vadd.f32 %v262, %v468
        %470 = vmatmul.bf16.gmra.mxu0 %v385
        %v471 = vpop.f32.mrf.mxu0
        %v472 = vadd.f32 %v262, %v471
        %v473 = vpop.f32.mrf.mxu0
        %v474 = vadd.f32 %v262, %v473
        %475 = vmatmul.bf16.gmra.mxu0 %v388
        %v476 = vpop.f32.mrf.mxu0
        %v477 = vadd.f32 %v262, %v476
        %v478 = vpop.f32.mrf.mxu0
        %v479 = vadd.f32 %v262, %v478
        %480 = vmatmul.bf16.gmra.mxu0 %v391
        %v481 = vpop.f32.mrf.mxu0
        %v482 = vadd.f32 %v262, %v481
        %v483 = vpop.f32.mrf.mxu0
        %v484 = vadd.f32 %v262, %v483
        %485 = vdwg.mxu0
        %v486 = vmax.f32 %v407, 0.0
        %v487 = vmax.f32 %v409, 0.0
        %v488 = vmax.f32 %v412, 0.0
        %v489 = vmax.f32 %v414, 0.0
        %v490 = vmax.f32 %v417, 0.0
        %v491 = vmax.f32 %v419, 0.0
        %v492 = vmax.f32 %v422, 0.0
        %v493 = vmax.f32 %v424, 0.0
        %v494 = vmax.f32 %v427, 0.0
        %v495 = vmax.f32 %v429, 0.0
        %v496 = vmax.f32 %v432, 0.0
        %v497 = vmax.f32 %v434, 0.0
        %v498 = vmax.f32 %v437, 0.0
        %v499 = vmax.f32 %v439, 0.0
        %v500 = vmax.f32 %v442, 0.0
        %v501 = vmax.f32 %v444, 0.0
        %v502 = vmax.f32 %v447, 0.0
        %v503 = vmax.f32 %v449, 0.0
        %v504 = vmax.f32 %v452, 0.0
        %v505 = vmax.f32 %v454, 0.0
        %v506 = vmax.f32 %v457, 0.0
        %v507 = vmax.f32 %v459, 0.0
        %v508 = vmax.f32 %v462, 0.0
        %v509 = vmax.f32 %v464, 0.0
        %v510 = vmax.f32 %v467, 0.0
        %v511 = vmax.f32 %v469, 0.0
        %v512 = vmax.f32 %v472, 0.0
        %v513 = vmax.f32 %v474, 0.0
        %v514 = vmax.f32 %v477, 0.0
        %v515 = vmax.f32 %v479, 0.0
        %v516 = vmax.f32 %v482, 0.0
        %v517 = vmax.f32 %v484, 0.0
        %v518 = vpack.c.bf16 %v487, %v486
        %v519 = vpack.c.bf16 %v489, %v488
        %v520 = vpack.c.bf16 %v491, %v490
        %v521 = vpack.c.bf16 %v493, %v492
        %v522 = vpack.c.bf16 %v495, %v494
        %v523 = vpack.c.bf16 %v497, %v496
        %v524 = vpack.c.bf16 %v499, %v498
        %v525 = vpack.c.bf16 %v501, %v500
        %v526 = vpack.c.bf16 %v503, %v502
        %v527 = vpack.c.bf16 %v505, %v504
        %v528 = vpack.c.bf16 %v507, %v506
        %v529 = vpack.c.bf16 %v509, %v508
        %v530 = vpack.c.bf16 %v511, %v510
        %v531 = vpack.c.bf16 %v513, %v512
        %v532 = vpack.c.bf16 %v515, %v514
        %v533 = vpack.c.bf16 %v517, %v516
        %v534 = vld [vmem:[%s3] sm:$0xf]
        %v535 = vld [vmem:[%s3 + $0x4] sm:$0xf]
        %v536 = vld [vmem:[%s3 + $0x8] sm:$0xf]
        %v537 = vld [vmem:[%s3 + $0xc] sm:$0xf]
        %v538 = vld [vmem:[%s3 + $0x10] sm:$0xf]
        %v539 = vld [vmem:[%s3 + $0x14] sm:$0xf]
        %v540 = vld [vmem:[%s3 + $0x18] sm:$0xf]
        %v541 = vld [vmem:[%s3 + $0x1c] sm:$0xf]
        %v542 = vld [vmem:[%s3 + $0x20] sm:$0xf]
        %v543 = vld [vmem:[%s3 + $0x24] sm:$0xf]
        %v544 = vld [vmem:[%s3 + $0x28] sm:$0xf]
        %v545 = vld [vmem:[%s3 + $0x2c] sm:$0xf]
        %v546 = vld [vmem:[%s3 + $0x30] sm:$0xf]
        %v547 = vld [vmem:[%s3 + $0x34] sm:$0xf]
        %v548 = vld [vmem:[%s3 + $0x38] sm:$0xf]
        %v549 = vld [vmem:[%s3 + $0x3c] sm:$0xf]
        %v550 = vld [vmem:[%s4] sm:$0x1]
        %v552 = vperm.slane %v550, 0
        %v570 = vunpack.c.l.b16 %v534
        %v571 = vunpack.c.l.b16 %v535
        %v572 = vunpack.c.l.b16 %v536
        %v573 = vunpack.c.l.b16 %v537
        %v574 = vunpack.c.l.b16 %v538
        %v575 = vunpack.c.l.b16 %v539
        %v576 = vunpack.c.l.b16 %v540
        %v577 = vunpack.c.l.b16 %v541
        %v578 = vunpack.c.l.b16 %v542
        %v579 = vunpack.c.l.b16 %v543
        %v580 = vunpack.c.l.b16 %v544
        %v581 = vunpack.c.l.b16 %v545
        %v582 = vunpack.c.l.b16 %v546
        %v583 = vunpack.c.l.b16 %v547
        %v584 = vunpack.c.l.b16 %v548
        %v585 = vunpack.c.l.b16 %v549
        %v586 = vpack.c.b16 %v571, %v570
        %v587 = vpack.c.b16 %v573, %v572
        %v588 = vpack.c.b16 %v575, %v574
        %v589 = vpack.c.b16 %v577, %v576
        %v590 = vpack.c.b16 %v579, %v578
        %v591 = vpack.c.b16 %v581, %v580
        %v592 = vpack.c.b16 %v583, %v582
        %v593 = vpack.c.b16 %v585, %v584
        %602 = vmatpush.bf16.msra.mxu0 %v593
        %603 = vmatpush.bf16.msra.mxu0 %v592
        %604 = vmatpush.bf16.msra.mxu0 %v591
        %605 = vmatpush.bf16.msra.mxu0 %v590
        %606 = vmatpush.bf16.msra.mxu0 %v589
        %607 = vmatpush.bf16.msra.mxu0 %v588
        %608 = vmatpush.bf16.msra.mxu0 %v587
        %609 = vmatpush.bf16.msra.mxu0 %v586
        %610 = vmatmul.bf16.gmra.mxu0 %v518
        %v611 = vpop.f32.mrf.mxu0
        %v612 = vadd.f32 %v552, %v611
        %v613 = vpop.f32.mrf.mxu0
        %v614 = vadd.f32 %v552, %v613
        %615 = vmatmul.bf16.gmra.mxu0 %v519
        %v616 = vpop.f32.mrf.mxu0
        %v617 = vadd.f32 %v552, %v616
        %v618 = vpop.f32.mrf.mxu0
        %v619 = vadd.f32 %v552, %v618
        %620 = vmatmul.bf16.gmra.mxu0 %v520
        %v621 = vpop.f32.mrf.mxu0
        %v622 = vadd.f32 %v552, %v621
        %v623 = vpop.f32.mrf.mxu0
        %v624 = vadd.f32 %v552, %v623
        %625 = vmatmul.bf16.gmra.mxu0 %v521
        %v626 = vpop.f32.mrf.mxu0
        %v627 = vadd.f32 %v552, %v626
        %v628 = vpop.f32.mrf.mxu0
        %v629 = vadd.f32 %v552, %v628
        %630 = vmatmul.bf16.gmra.mxu0 %v522
        %v631 = vpop.f32.mrf.mxu0
        %v632 = vadd.f32 %v552, %v631
        %v633 = vpop.f32.mrf.mxu0
        %v634 = vadd.f32 %v552, %v633
        %635 = vmatmul.bf16.gmra.mxu0 %v523
        %v636 = vpop.f32.mrf.mxu0
        %v637 = vadd.f32 %v552, %v636
        %v638 = vpop.f32.mrf.mxu0
        %v639 = vadd.f32 %v552, %v638
        %640 = vmatmul.bf16.gmra.mxu0 %v524
        %v641 = vpop.f32.mrf.mxu0
        %v642 = vadd.f32 %v552, %v641
        %v643 = vpop.f32.mrf.mxu0
        %v644 = vadd.f32 %v552, %v643
        %645 = vmatmul.bf16.gmra.mxu0 %v525
        %v646 = vpop.f32.mrf.mxu0
        %v647 = vadd.f32 %v552, %v646
        %v648 = vpop.f32.mrf.mxu0
        %v649 = vadd.f32 %v552, %v648
        %650 = vmatmul.bf16.gmra.mxu0 %v526
        %v651 = vpop.f32.mrf.mxu0
        %v652 = vadd.f32 %v552, %v651
        %v653 = vpop.f32.mrf.mxu0
        %v654 = vadd.f32 %v552, %v653
        %655 = vmatmul.bf16.gmra.mxu0 %v527
        %v656 = vpop.f32.mrf.mxu0
        %v657 = vadd.f32 %v552, %v656
        %v658 = vpop.f32.mrf.mxu0
        %v659 = vadd.f32 %v552, %v658
        %660 = vmatmul.bf16.gmra.mxu0 %v528
        %v661 = vpop.f32.mrf.mxu0
        %v662 = vadd.f32 %v552, %v661
        %v663 = vpop.f32.mrf.mxu0
        %v664 = vadd.f32 %v552, %v663
        %665 = vmatmul.bf16.gmra.mxu0 %v529
        %v666 = vpop.f32.mrf.mxu0
        %v667 = vadd.f32 %v552, %v666
        %v668 = vpop.f32.mrf.mxu0
        %v669 = vadd.f32 %v552, %v668
        %670 = vmatmul.bf16.gmra.mxu0 %v530
        %v671 = vpop.f32.mrf.mxu0
        %v672 = vadd.f32 %v552, %v671
        %v673 = vpop.f32.mrf.mxu0
        %v674 = vadd.f32 %v552, %v673
        %675 = vmatmul.bf16.gmra.mxu0 %v531
        %v676 = vpop.f32.mrf.mxu0
        %v677 = vadd.f32 %v552, %v676
        %v678 = vpop.f32.mrf.mxu0
        %v679 = vadd.f32 %v552, %v678
        %680 = vmatmul.bf16.gmra.mxu0 %v532
        %v681 = vpop.f32.mrf.mxu0
        %v682 = vadd.f32 %v552, %v681
        %v683 = vpop.f32.mrf.mxu0
        %v684 = vadd.f32 %v552, %v683
        %685 = vmatmul.bf16.gmra.mxu0 %v533
        %v686 = vpop.f32.mrf.mxu0
        %v687 = vadd.f32 %v552, %v686
        %v688 = vpop.f32.mrf.mxu0
        %v689 = vadd.f32 %v552, %v688
        %690 = vdwg.mxu0
        %v691 = vlaneseq
        %v692 = vand.u32 %v691, 127
        %vm693 = vcmp.eq.s32.totalorder %v692, 0
        %vm694 = vcmp.le.s32.totalorder %v692, 4
        %v695 = vxor.u32 %v612, 2147483648
        %v696 = vxor.u32 %v614, 2147483648
        %v697 = vxor.u32 %v617, 2147483648
        %v698 = vxor.u32 %v619, 2147483648
        %v699 = vxor.u32 %v622, 2147483648
        %v700 = vxor.u32 %v624, 2147483648
        %v701 = vxor.u32 %v627, 2147483648
        %v702 = vxor.u32 %v629, 2147483648
        %v703 = vxor.u32 %v632, 2147483648
        %v704 = vxor.u32 %v634, 2147483648
        %v705 = vxor.u32 %v637, 2147483648
        %v706 = vxor.u32 %v639, 2147483648
        %v707 = vxor.u32 %v642, 2147483648
        %v708 = vxor.u32 %v644, 2147483648
        %v709 = vxor.u32 %v647, 2147483648
        %v710 = vxor.u32 %v649, 2147483648
        %v711 = vxor.u32 %v652, 2147483648
        %v712 = vxor.u32 %v654, 2147483648
        %v713 = vxor.u32 %v657, 2147483648
        %v714 = vxor.u32 %v659, 2147483648
        %v715 = vxor.u32 %v662, 2147483648
        %v716 = vxor.u32 %v664, 2147483648
        %v717 = vxor.u32 %v667, 2147483648
        %v718 = vxor.u32 %v669, 2147483648
        %v719 = vxor.u32 %v672, 2147483648
        %v720 = vxor.u32 %v674, 2147483648
        %v721 = vxor.u32 %v677, 2147483648
        %v722 = vxor.u32 %v679, 2147483648
        %v723 = vxor.u32 %v682, 2147483648
        %v724 = vxor.u32 %v684, 2147483648
        %v725 = vxor.u32 %v687, 2147483648
        %v726 = vxor.u32 %v689, 2147483648
        %v727 = vmul.f32 %v695, 1.442695
        %v728 = vpow.pop %v727
        %v729 = vmul.f32 %v696, 1.442695
        %v730 = vpow.pop %v729
        %v731 = vmul.f32 %v697, 1.442695
        %v732 = vpow.pop %v731
        %v733 = vmul.f32 %v698, 1.442695
        %v734 = vpow.pop %v733
        %v735 = vmul.f32 %v699, 1.442695
        %v736 = vpow.pop %v735
        %v737 = vmul.f32 %v700, 1.442695
        %v738 = vpow.pop %v737
        %v739 = vmul.f32 %v701, 1.442695
        %v740 = vpow.pop %v739
        %v741 = vmul.f32 %v702, 1.442695
        %v742 = vpow.pop %v741
        %v743 = vmul.f32 %v703, 1.442695
        %v744 = vpow.pop %v743
        %v745 = vmul.f32 %v704, 1.442695
        %v746 = vpow.pop %v745
        %v747 = vmul.f32 %v705, 1.442695
        %v748 = vpow.pop %v747
        %v749 = vmul.f32 %v706, 1.442695
        %v750 = vpow.pop %v749
        %v751 = vmul.f32 %v707, 1.442695
        %v752 = vpow.pop %v751
        %v753 = vmul.f32 %v708, 1.442695
        %v754 = vpow.pop %v753
        %v755 = vmul.f32 %v709, 1.442695
        %v756 = vpow.pop %v755
        %v757 = vmul.f32 %v710, 1.442695
        %v758 = vpow.pop %v757
        %v759 = vmul.f32 %v711, 1.442695
        %v760 = vpow.pop %v759
        %v761 = vmul.f32 %v712, 1.442695
        %v762 = vpow.pop %v761
        %v763 = vmul.f32 %v713, 1.442695
        %v764 = vpow.pop %v763
        %v765 = vmul.f32 %v714, 1.442695
        %v766 = vpow.pop %v765
        %v767 = vmul.f32 %v715, 1.442695
        %v768 = vpow.pop %v767
        %v769 = vmul.f32 %v716, 1.442695
        %v770 = vpow.pop %v769
        %v771 = vmul.f32 %v717, 1.442695
        %v772 = vpow.pop %v771
        %v773 = vmul.f32 %v718, 1.442695
        %v774 = vpow.pop %v773
        %v775 = vmul.f32 %v719, 1.442695
        %v776 = vpow.pop %v775
        %v777 = vmul.f32 %v720, 1.442695
        %v778 = vpow.pop %v777
        %v779 = vmul.f32 %v721, 1.442695
        %v780 = vpow.pop %v779
        %v781 = vmul.f32 %v722, 1.442695
        %v782 = vpow.pop %v781
        %v783 = vmul.f32 %v723, 1.442695
        %v784 = vpow.pop %v783
        %v785 = vmul.f32 %v724, 1.442695
        %v786 = vpow.pop %v785
        %v787 = vmul.f32 %v725, 1.442695
        %v788 = vpow.pop %v787
        %v789 = vmul.f32 %v726, 1.442695
        %v790 = vpow.pop %v789
        %v791 = vadd.f32 %v728, 1.0
        %v792 = vadd.f32 %v730, 1.0
        %v793 = vadd.f32 %v732, 1.0
        %v794 = vadd.f32 %v734, 1.0
        %v795 = vadd.f32 %v736, 1.0
        %v796 = vadd.f32 %v738, 1.0
        %v797 = vadd.f32 %v740, 1.0
        %v798 = vadd.f32 %v742, 1.0
        %v799 = vadd.f32 %v744, 1.0
        %v800 = vadd.f32 %v746, 1.0
        %v801 = vadd.f32 %v748, 1.0
        %v802 = vadd.f32 %v750, 1.0
        %v803 = vadd.f32 %v752, 1.0
        %v804 = vadd.f32 %v754, 1.0
        %v805 = vadd.f32 %v756, 1.0
        %v806 = vadd.f32 %v758, 1.0
        %v807 = vadd.f32 %v760, 1.0
        %v808 = vadd.f32 %v762, 1.0
        %v809 = vadd.f32 %v764, 1.0
        %v810 = vadd.f32 %v766, 1.0
        %v811 = vadd.f32 %v768, 1.0
        %v812 = vadd.f32 %v770, 1.0
        %v813 = vadd.f32 %v772, 1.0
        %v814 = vadd.f32 %v774, 1.0
        %v815 = vadd.f32 %v776, 1.0
        %v816 = vadd.f32 %v778, 1.0
        %v817 = vadd.f32 %v780, 1.0
        %v818 = vadd.f32 %v782, 1.0
        %v819 = vadd.f32 %v784, 1.0
        %v820 = vadd.f32 %v786, 1.0
        %v821 = vadd.f32 %v788, 1.0
        %v822 = vadd.f32 %v790, 1.0
        %v823 = vrcp.pop %v791
        %v824 = vmul.f32 %v791, %v823
        %v825 = vsub.f32 1.0, %v824
        %v826 = vmul.f32 %v823, %v825
        %v827 = vadd.f32 %v823, %v826
        %vm828 = vweird.f32 %v791
        %vm829 = vweird.f32 %v823
        %vm830 = vmor %vm828, %vm829
        %v831 = vsel %vm830, %v823, %v827
        %v832 = vand.u32 2147483647, %v791
        %vm833 = vcmp.eq.f32.partialorder %v832, 8.507059e+37
        %v834 = vand.u32 %v791, 2147483648
        %v835 = vor.u32 1.1754944e-38, %v834
        %v836 = vsel %vm833, %v835, %v831
        %v837 = vmul.f32 1.0, %v836
        %v838 = vrcp.pop %v792
        %v839 = vmul.f32 %v792, %v838
        %v840 = vsub.f32 1.0, %v839
        %v841 = vmul.f32 %v838, %v840
        %v842 = vadd.f32 %v838, %v841
        %vm843 = vweird.f32 %v792
        %vm844 = vweird.f32 %v838
        %vm845 = vmor %vm843, %vm844
        %v846 = vsel %vm845, %v838, %v842
        %v847 = vand.u32 2147483647, %v792
        %vm848 = vcmp.eq.f32.partialorder %v847, 8.507059e+37
        %v849 = vand.u32 %v792, 2147483648
        %v850 = vor.u32 1.1754944e-38, %v849
        %v851 = vsel %vm848, %v850, %v846
        %v852 = vmul.f32 1.0, %v851
        %v853 = vrcp.pop %v793
        %v854 = vmul.f32 %v793, %v853
        %v855 = vsub.f32 1.0, %v854
        %v856 = vmul.f32 %v853, %v855
        %v857 = vadd.f32 %v853, %v856
        %vm858 = vweird.f32 %v793
        %vm859 = vweird.f32 %v853
        %vm860 = vmor %vm858, %vm859
        %v861 = vsel %vm860, %v853, %v857
        %v862 = vand.u32 2147483647, %v793
        %vm863 = vcmp.eq.f32.partialorder %v862, 8.507059e+37
        %v864 = vand.u32 %v793, 2147483648
        %v865 = vor.u32 1.1754944e-38, %v864
        %v866 = vsel %vm863, %v865, %v861
        %v867 = vmul.f32 1.0, %v866
        %v868 = vrcp.pop %v794
        %v869 = vmul.f32 %v794, %v868
        %v870 = vsub.f32 1.0, %v869
        %v871 = vmul.f32 %v868, %v870
        %v872 = vadd.f32 %v868, %v871
        %vm873 = vweird.f32 %v794
        %vm874 = vweird.f32 %v868
        %vm875 = vmor %vm873, %vm874
        %v876 = vsel %vm875, %v868, %v872
        %v877 = vand.u32 2147483647, %v794
        %vm878 = vcmp.eq.f32.partialorder %v877, 8.507059e+37
        %v879 = vand.u32 %v794, 2147483648
        %v880 = vor.u32 1.1754944e-38, %v879
        %v881 = vsel %vm878, %v880, %v876
        %v882 = vmul.f32 1.0, %v881
        %v883 = vrcp.pop %v795
        %v884 = vmul.f32 %v795, %v883
        %v885 = vsub.f32 1.0, %v884
        %v886 = vmul.f32 %v883, %v885
        %v887 = vadd.f32 %v883, %v886
        %vm888 = vweird.f32 %v795
        %vm889 = vweird.f32 %v883
        %vm890 = vmor %vm888, %vm889
        %v891 = vsel %vm890, %v883, %v887
        %v892 = vand.u32 2147483647, %v795
        %vm893 = vcmp.eq.f32.partialorder %v892, 8.507059e+37
        %v894 = vand.u32 %v795, 2147483648
        %v895 = vor.u32 1.1754944e-38, %v894
        %v896 = vsel %vm893, %v895, %v891
        %v897 = vmul.f32 1.0, %v896
        %v898 = vrcp.pop %v796
        %v899 = vmul.f32 %v796, %v898
        %v900 = vsub.f32 1.0, %v899
        %v901 = vmul.f32 %v898, %v900
        %v902 = vadd.f32 %v898, %v901
        %vm903 = vweird.f32 %v796
        %vm904 = vweird.f32 %v898
        %vm905 = vmor %vm903, %vm904
        %v906 = vsel %vm905, %v898, %v902
        %v907 = vand.u32 2147483647, %v796
        %vm908 = vcmp.eq.f32.partialorder %v907, 8.507059e+37
        %v909 = vand.u32 %v796, 2147483648
        %v910 = vor.u32 1.1754944e-38, %v909
        %v911 = vsel %vm908, %v910, %v906
        %v912 = vmul.f32 1.0, %v911
        %v913 = vrcp.pop %v797
        %v914 = vmul.f32 %v797, %v913
        %v915 = vsub.f32 1.0, %v914
        %v916 = vmul.f32 %v913, %v915
        %v917 = vadd.f32 %v913, %v916
        %vm918 = vweird.f32 %v797
        %vm919 = vweird.f32 %v913
        %vm920 = vmor %vm918, %vm919
        %v921 = vsel %vm920, %v913, %v917
        %v922 = vand.u32 2147483647, %v797
        %vm923 = vcmp.eq.f32.partialorder %v922, 8.507059e+37
        %v924 = vand.u32 %v797, 2147483648
        %v925 = vor.u32 1.1754944e-38, %v924
        %v926 = vsel %vm923, %v925, %v921
        %v927 = vmul.f32 1.0, %v926
        %v928 = vrcp.pop %v798
        %v929 = vmul.f32 %v798, %v928
        %v930 = vsub.f32 1.0, %v929
        %v931 = vmul.f32 %v928, %v930
        %v932 = vadd.f32 %v928, %v931
        %vm933 = vweird.f32 %v798
        %vm934 = vweird.f32 %v928
        %vm935 = vmor %vm933, %vm934
        %v936 = vsel %vm935, %v928, %v932
        %v937 = vand.u32 2147483647, %v798
        %vm938 = vcmp.eq.f32.partialorder %v937, 8.507059e+37
        %v939 = vand.u32 %v798, 2147483648
        %v940 = vor.u32 1.1754944e-38, %v939
        %v941 = vsel %vm938, %v940, %v936
        %v942 = vmul.f32 1.0, %v941
        %v943 = vrcp.pop %v799
        %v944 = vmul.f32 %v799, %v943
        %v945 = vsub.f32 1.0, %v944
        %v946 = vmul.f32 %v943, %v945
        %v947 = vadd.f32 %v943, %v946
        %vm948 = vweird.f32 %v799
        %vm949 = vweird.f32 %v943
        %vm950 = vmor %vm948, %vm949
        %v951 = vsel %vm950, %v943, %v947
        %v952 = vand.u32 2147483647, %v799
        %vm953 = vcmp.eq.f32.partialorder %v952, 8.507059e+37
        %v954 = vand.u32 %v799, 2147483648
        %v955 = vor.u32 1.1754944e-38, %v954
        %v956 = vsel %vm953, %v955, %v951
        %v957 = vmul.f32 1.0, %v956
        %v958 = vrcp.pop %v800
        %v959 = vmul.f32 %v800, %v958
        %v960 = vsub.f32 1.0, %v959
        %v961 = vmul.f32 %v958, %v960
        %v962 = vadd.f32 %v958, %v961
        %vm963 = vweird.f32 %v800
        %vm964 = vweird.f32 %v958
        %vm965 = vmor %vm963, %vm964
        %v966 = vsel %vm965, %v958, %v962
        %v967 = vand.u32 2147483647, %v800
        %vm968 = vcmp.eq.f32.partialorder %v967, 8.507059e+37
        %v969 = vand.u32 %v800, 2147483648
        %v970 = vor.u32 1.1754944e-38, %v969
        %v971 = vsel %vm968, %v970, %v966
        %v972 = vmul.f32 1.0, %v971
        %v973 = vrcp.pop %v801
        %v974 = vmul.f32 %v801, %v973
        %v975 = vsub.f32 1.0, %v974
        %v976 = vmul.f32 %v973, %v975
        %v977 = vadd.f32 %v973, %v976
        %vm978 = vweird.f32 %v801
        %vm979 = vweird.f32 %v973
        %vm980 = vmor %vm978, %vm979
        %v981 = vsel %vm980, %v973, %v977
        %v982 = vand.u32 2147483647, %v801
        %vm983 = vcmp.eq.f32.partialorder %v982, 8.507059e+37
        %v984 = vand.u32 %v801, 2147483648
        %v985 = vor.u32 1.1754944e-38, %v984
        %v986 = vsel %vm983, %v985, %v981
        %v987 = vmul.f32 1.0, %v986
        %v988 = vrcp.pop %v802
        %v989 = vmul.f32 %v802, %v988
        %v990 = vsub.f32 1.0, %v989
        %v991 = vmul.f32 %v988, %v990
        %v992 = vadd.f32 %v988, %v991
        %vm993 = vweird.f32 %v802
        %vm994 = vweird.f32 %v988
        %vm995 = vmor %vm993, %vm994
        %v996 = vsel %vm995, %v988, %v992
        %v997 = vand.u32 2147483647, %v802
        %vm998 = vcmp.eq.f32.partialorder %v997, 8.507059e+37
        %v999 = vand.u32 %v802, 2147483648
        %v1000 = vor.u32 1.1754944e-38, %v999
        %v1001 = vsel %vm998, %v1000, %v996
        %v1002 = vmul.f32 1.0, %v1001
        %v1003 = vrcp.pop %v803
        %v1004 = vmul.f32 %v803, %v1003
        %v1005 = vsub.f32 1.0, %v1004
        %v1006 = vmul.f32 %v1003, %v1005
        %v1007 = vadd.f32 %v1003, %v1006
        %vm1008 = vweird.f32 %v803
        %vm1009 = vweird.f32 %v1003
        %vm1010 = vmor %vm1008, %vm1009
        %v1011 = vsel %vm1010, %v1003, %v1007
        %v1012 = vand.u32 2147483647, %v803
        %vm1013 = vcmp.eq.f32.partialorder %v1012, 8.507059e+37
        %v1014 = vand.u32 %v803, 2147483648
        %v1015 = vor.u32 1.1754944e-38, %v1014
        %v1016 = vsel %vm1013, %v1015, %v1011
        %v1017 = vmul.f32 1.0, %v1016
        %v1018 = vrcp.pop %v804
        %v1019 = vmul.f32 %v804, %v1018
        %v1020 = vsub.f32 1.0, %v1019
        %v1021 = vmul.f32 %v1018, %v1020
        %v1022 = vadd.f32 %v1018, %v1021
        %vm1023 = vweird.f32 %v804
        %vm1024 = vweird.f32 %v1018
        %vm1025 = vmor %vm1023, %vm1024
        %v1026 = vsel %vm1025, %v1018, %v1022
        %v1027 = vand.u32 2147483647, %v804
        %vm1028 = vcmp.eq.f32.partialorder %v1027, 8.507059e+37
        %v1029 = vand.u32 %v804, 2147483648
        %v1030 = vor.u32 1.1754944e-38, %v1029
        %v1031 = vsel %vm1028, %v1030, %v1026
        %v1032 = vmul.f32 1.0, %v1031
        %v1033 = vrcp.pop %v805
        %v1034 = vmul.f32 %v805, %v1033
        %v1035 = vsub.f32 1.0, %v1034
        %v1036 = vmul.f32 %v1033, %v1035
        %v1037 = vadd.f32 %v1033, %v1036
        %vm1038 = vweird.f32 %v805
        %vm1039 = vweird.f32 %v1033
        %vm1040 = vmor %vm1038, %vm1039
        %v1041 = vsel %vm1040, %v1033, %v1037
        %v1042 = vand.u32 2147483647, %v805
        %vm1043 = vcmp.eq.f32.partialorder %v1042, 8.507059e+37
        %v1044 = vand.u32 %v805, 2147483648
        %v1045 = vor.u32 1.1754944e-38, %v1044
        %v1046 = vsel %vm1043, %v1045, %v1041
        %v1047 = vmul.f32 1.0, %v1046
        %v1048 = vrcp.pop %v806
        %v1049 = vmul.f32 %v806, %v1048
        %v1050 = vsub.f32 1.0, %v1049
        %v1051 = vmul.f32 %v1048, %v1050
        %v1052 = vadd.f32 %v1048, %v1051
        %vm1053 = vweird.f32 %v806
        %vm1054 = vweird.f32 %v1048
        %vm1055 = vmor %vm1053, %vm1054
        %v1056 = vsel %vm1055, %v1048, %v1052
        %v1057 = vand.u32 2147483647, %v806
        %vm1058 = vcmp.eq.f32.partialorder %v1057, 8.507059e+37
        %v1059 = vand.u32 %v806, 2147483648
        %v1060 = vor.u32 1.1754944e-38, %v1059
        %v1061 = vsel %vm1058, %v1060, %v1056
        %v1062 = vmul.f32 1.0, %v1061
        %v1063 = vrcp.pop %v807
        %v1064 = vmul.f32 %v807, %v1063
        %v1065 = vsub.f32 1.0, %v1064
        %v1066 = vmul.f32 %v1063, %v1065
        %v1067 = vadd.f32 %v1063, %v1066
        %vm1068 = vweird.f32 %v807
        %vm1069 = vweird.f32 %v1063
        %vm1070 = vmor %vm1068, %vm1069
        %v1071 = vsel %vm1070, %v1063, %v1067
        %v1072 = vand.u32 2147483647, %v807
        %vm1073 = vcmp.eq.f32.partialorder %v1072, 8.507059e+37
        %v1074 = vand.u32 %v807, 2147483648
        %v1075 = vor.u32 1.1754944e-38, %v1074
        %v1076 = vsel %vm1073, %v1075, %v1071
        %v1077 = vmul.f32 1.0, %v1076
        %v1078 = vrcp.pop %v808
        %v1079 = vmul.f32 %v808, %v1078
        %v1080 = vsub.f32 1.0, %v1079
        %v1081 = vmul.f32 %v1078, %v1080
        %v1082 = vadd.f32 %v1078, %v1081
        %vm1083 = vweird.f32 %v808
        %vm1084 = vweird.f32 %v1078
        %vm1085 = vmor %vm1083, %vm1084
        %v1086 = vsel %vm1085, %v1078, %v1082
        %v1087 = vand.u32 2147483647, %v808
        %vm1088 = vcmp.eq.f32.partialorder %v1087, 8.507059e+37
        %v1089 = vand.u32 %v808, 2147483648
        %v1090 = vor.u32 1.1754944e-38, %v1089
        %v1091 = vsel %vm1088, %v1090, %v1086
        %v1092 = vmul.f32 1.0, %v1091
        %v1093 = vrcp.pop %v809
        %v1094 = vmul.f32 %v809, %v1093
        %v1095 = vsub.f32 1.0, %v1094
        %v1096 = vmul.f32 %v1093, %v1095
        %v1097 = vadd.f32 %v1093, %v1096
        %vm1098 = vweird.f32 %v809
        %vm1099 = vweird.f32 %v1093
        %vm1100 = vmor %vm1098, %vm1099
        %v1101 = vsel %vm1100, %v1093, %v1097
        %v1102 = vand.u32 2147483647, %v809
        %vm1103 = vcmp.eq.f32.partialorder %v1102, 8.507059e+37
        %v1104 = vand.u32 %v809, 2147483648
        %v1105 = vor.u32 1.1754944e-38, %v1104
        %v1106 = vsel %vm1103, %v1105, %v1101
        %v1107 = vmul.f32 1.0, %v1106
        %v1108 = vrcp.pop %v810
        %v1109 = vmul.f32 %v810, %v1108
        %v1110 = vsub.f32 1.0, %v1109
        %v1111 = vmul.f32 %v1108, %v1110
        %v1112 = vadd.f32 %v1108, %v1111
        %vm1113 = vweird.f32 %v810
        %vm1114 = vweird.f32 %v1108
        %vm1115 = vmor %vm1113, %vm1114
        %v1116 = vsel %vm1115, %v1108, %v1112
        %v1117 = vand.u32 2147483647, %v810
        %vm1118 = vcmp.eq.f32.partialorder %v1117, 8.507059e+37
        %v1119 = vand.u32 %v810, 2147483648
        %v1120 = vor.u32 1.1754944e-38, %v1119
        %v1121 = vsel %vm1118, %v1120, %v1116
        %v1122 = vmul.f32 1.0, %v1121
        %v1123 = vrcp.pop %v811
        %v1124 = vmul.f32 %v811, %v1123
        %v1125 = vsub.f32 1.0, %v1124
        %v1126 = vmul.f32 %v1123, %v1125
        %v1127 = vadd.f32 %v1123, %v1126
        %vm1128 = vweird.f32 %v811
        %vm1129 = vweird.f32 %v1123
        %vm1130 = vmor %vm1128, %vm1129
        %v1131 = vsel %vm1130, %v1123, %v1127
        %v1132 = vand.u32 2147483647, %v811
        %vm1133 = vcmp.eq.f32.partialorder %v1132, 8.507059e+37
        %v1134 = vand.u32 %v811, 2147483648
        %v1135 = vor.u32 1.1754944e-38, %v1134
        %v1136 = vsel %vm1133, %v1135, %v1131
        %v1137 = vmul.f32 1.0, %v1136
        %v1138 = vrcp.pop %v812
        %v1139 = vmul.f32 %v812, %v1138
        %v1140 = vsub.f32 1.0, %v1139
        %v1141 = vmul.f32 %v1138, %v1140
        %v1142 = vadd.f32 %v1138, %v1141
        %vm1143 = vweird.f32 %v812
        %vm1144 = vweird.f32 %v1138
        %vm1145 = vmor %vm1143, %vm1144
        %v1146 = vsel %vm1145, %v1138, %v1142
        %v1147 = vand.u32 2147483647, %v812
        %vm1148 = vcmp.eq.f32.partialorder %v1147, 8.507059e+37
        %v1149 = vand.u32 %v812, 2147483648
        %v1150 = vor.u32 1.1754944e-38, %v1149
        %v1151 = vsel %vm1148, %v1150, %v1146
        %v1152 = vmul.f32 1.0, %v1151
        %v1153 = vrcp.pop %v813
        %v1154 = vmul.f32 %v813, %v1153
        %v1155 = vsub.f32 1.0, %v1154
        %v1156 = vmul.f32 %v1153, %v1155
        %v1157 = vadd.f32 %v1153, %v1156
        %vm1158 = vweird.f32 %v813
        %vm1159 = vweird.f32 %v1153
        %vm1160 = vmor %vm1158, %vm1159
        %v1161 = vsel %vm1160, %v1153, %v1157
        %v1162 = vand.u32 2147483647, %v813
        %vm1163 = vcmp.eq.f32.partialorder %v1162, 8.507059e+37
        %v1164 = vand.u32 %v813, 2147483648
        %v1165 = vor.u32 1.1754944e-38, %v1164
        %v1166 = vsel %vm1163, %v1165, %v1161
        %v1167 = vmul.f32 1.0, %v1166
        %v1168 = vrcp.pop %v814
        %v1169 = vmul.f32 %v814, %v1168
        %v1170 = vsub.f32 1.0, %v1169
        %v1171 = vmul.f32 %v1168, %v1170
        %v1172 = vadd.f32 %v1168, %v1171
        %vm1173 = vweird.f32 %v814
        %vm1174 = vweird.f32 %v1168
        %vm1175 = vmor %vm1173, %vm1174
        %v1176 = vsel %vm1175, %v1168, %v1172
        %v1177 = vand.u32 2147483647, %v814
        %vm1178 = vcmp.eq.f32.partialorder %v1177, 8.507059e+37
        %v1179 = vand.u32 %v814, 2147483648
        %v1180 = vor.u32 1.1754944e-38, %v1179
        %v1181 = vsel %vm1178, %v1180, %v1176
        %v1182 = vmul.f32 1.0, %v1181
        %v1183 = vrcp.pop %v815
        %v1184 = vmul.f32 %v815, %v1183
        %v1185 = vsub.f32 1.0, %v1184
        %v1186 = vmul.f32 %v1183, %v1185
        %v1187 = vadd.f32 %v1183, %v1186
        %vm1188 = vweird.f32 %v815
        %vm1189 = vweird.f32 %v1183
        %vm1190 = vmor %vm1188, %vm1189
        %v1191 = vsel %vm1190, %v1183, %v1187
        %v1192 = vand.u32 2147483647, %v815
        %vm1193 = vcmp.eq.f32.partialorder %v1192, 8.507059e+37
        %v1194 = vand.u32 %v815, 2147483648
        %v1195 = vor.u32 1.1754944e-38, %v1194
        %v1196 = vsel %vm1193, %v1195, %v1191
        %v1197 = vmul.f32 1.0, %v1196
        %v1198 = vrcp.pop %v816
        %v1199 = vmul.f32 %v816, %v1198
        %v1200 = vsub.f32 1.0, %v1199
        %v1201 = vmul.f32 %v1198, %v1200
        %v1202 = vadd.f32 %v1198, %v1201
        %vm1203 = vweird.f32 %v816
        %vm1204 = vweird.f32 %v1198
        %vm1205 = vmor %vm1203, %vm1204
        %v1206 = vsel %vm1205, %v1198, %v1202
        %v1207 = vand.u32 2147483647, %v816
        %vm1208 = vcmp.eq.f32.partialorder %v1207, 8.507059e+37
        %v1209 = vand.u32 %v816, 2147483648
        %v1210 = vor.u32 1.1754944e-38, %v1209
        %v1211 = vsel %vm1208, %v1210, %v1206
        %v1212 = vmul.f32 1.0, %v1211
        %v1213 = vrcp.pop %v817
        %v1214 = vmul.f32 %v817, %v1213
        %v1215 = vsub.f32 1.0, %v1214
        %v1216 = vmul.f32 %v1213, %v1215
        %v1217 = vadd.f32 %v1213, %v1216
        %vm1218 = vweird.f32 %v817
        %vm1219 = vweird.f32 %v1213
        %vm1220 = vmor %vm1218, %vm1219
        %v1221 = vsel %vm1220, %v1213, %v1217
        %v1222 = vand.u32 2147483647, %v817
        %vm1223 = vcmp.eq.f32.partialorder %v1222, 8.507059e+37
        %v1224 = vand.u32 %v817, 2147483648
        %v1225 = vor.u32 1.1754944e-38, %v1224
        %v1226 = vsel %vm1223, %v1225, %v1221
        %v1227 = vmul.f32 1.0, %v1226
        %v1228 = vrcp.pop %v818
        %v1229 = vmul.f32 %v818, %v1228
        %v1230 = vsub.f32 1.0, %v1229
        %v1231 = vmul.f32 %v1228, %v1230
        %v1232 = vadd.f32 %v1228, %v1231
        %vm1233 = vweird.f32 %v818
        %vm1234 = vweird.f32 %v1228
        %vm1235 = vmor %vm1233, %vm1234
        %v1236 = vsel %vm1235, %v1228, %v1232
        %v1237 = vand.u32 2147483647, %v818
        %vm1238 = vcmp.eq.f32.partialorder %v1237, 8.507059e+37
        %v1239 = vand.u32 %v818, 2147483648
        %v1240 = vor.u32 1.1754944e-38, %v1239
        %v1241 = vsel %vm1238, %v1240, %v1236
        %v1242 = vmul.f32 1.0, %v1241
        %v1243 = vrcp.pop %v819
        %v1244 = vmul.f32 %v819, %v1243
        %v1245 = vsub.f32 1.0, %v1244
        %v1246 = vmul.f32 %v1243, %v1245
        %v1247 = vadd.f32 %v1243, %v1246
        %vm1248 = vweird.f32 %v819
        %vm1249 = vweird.f32 %v1243
        %vm1250 = vmor %vm1248, %vm1249
        %v1251 = vsel %vm1250, %v1243, %v1247
        %v1252 = vand.u32 2147483647, %v819
        %vm1253 = vcmp.eq.f32.partialorder %v1252, 8.507059e+37
        %v1254 = vand.u32 %v819, 2147483648
        %v1255 = vor.u32 1.1754944e-38, %v1254
        %v1256 = vsel %vm1253, %v1255, %v1251
        %v1257 = vmul.f32 1.0, %v1256
        %v1258 = vrcp.pop %v820
        %v1259 = vmul.f32 %v820, %v1258
        %v1260 = vsub.f32 1.0, %v1259
        %v1261 = vmul.f32 %v1258, %v1260
        %v1262 = vadd.f32 %v1258, %v1261
        %vm1263 = vweird.f32 %v820
        %vm1264 = vweird.f32 %v1258
        %vm1265 = vmor %vm1263, %vm1264
        %v1266 = vsel %vm1265, %v1258, %v1262
        %v1267 = vand.u32 2147483647, %v820
        %vm1268 = vcmp.eq.f32.partialorder %v1267, 8.507059e+37
        %v1269 = vand.u32 %v820, 2147483648
        %v1270 = vor.u32 1.1754944e-38, %v1269
        %v1271 = vsel %vm1268, %v1270, %v1266
        %v1272 = vmul.f32 1.0, %v1271
        %v1273 = vrcp.pop %v821
        %v1274 = vmul.f32 %v821, %v1273
        %v1275 = vsub.f32 1.0, %v1274
        %v1276 = vmul.f32 %v1273, %v1275
        %v1277 = vadd.f32 %v1273, %v1276
        %vm1278 = vweird.f32 %v821
        %vm1279 = vweird.f32 %v1273
        %vm1280 = vmor %vm1278, %vm1279
        %v1281 = vsel %vm1280, %v1273, %v1277
        %v1282 = vand.u32 2147483647, %v821
        %vm1283 = vcmp.eq.f32.partialorder %v1282, 8.507059e+37
        %v1284 = vand.u32 %v821, 2147483648
        %v1285 = vor.u32 1.1754944e-38, %v1284
        %v1286 = vsel %vm1283, %v1285, %v1281
        %v1287 = vmul.f32 1.0, %v1286
        %v1288 = vrcp.pop %v822
        %v1289 = vmul.f32 %v822, %v1288
        %v1290 = vsub.f32 1.0, %v1289
        %v1291 = vmul.f32 %v1288, %v1290
        %v1292 = vadd.f32 %v1288, %v1291
        %vm1293 = vweird.f32 %v822
        %vm1294 = vweird.f32 %v1288
        %vm1295 = vmor %vm1293, %vm1294
        %v1296 = vsel %vm1295, %v1288, %v1292
        %v1297 = vand.u32 2147483647, %v822
        %vm1298 = vcmp.eq.f32.partialorder %v1297, 8.507059e+37
        %v1299 = vand.u32 %v822, 2147483648
        %v1300 = vor.u32 1.1754944e-38, %v1299
        %v1301 = vsel %vm1298, %v1300, %v1296
        %v1302 = vmul.f32 1.0, %v1301
        %v1303 = vsel %vm694, %v837, 0.0
        %v1304 = vsel %vm694, %v852, 0.0
        %v1305 = vsel %vm694, %v867, 0.0
        %v1306 = vsel %vm694, %v882, 0.0
        %v1307 = vsel %vm694, %v897, 0.0
        %v1308 = vsel %vm694, %v912, 0.0
        %v1309 = vsel %vm694, %v927, 0.0
        %v1310 = vsel %vm694, %v942, 0.0
        %v1311 = vsel %vm694, %v957, 0.0
        %v1312 = vsel %vm694, %v972, 0.0
        %v1313 = vsel %vm694, %v987, 0.0
        %v1314 = vsel %vm694, %v1002, 0.0
        %v1315 = vsel %vm694, %v1017, 0.0
        %v1316 = vsel %vm694, %v1032, 0.0
        %v1317 = vsel %vm694, %v1047, 0.0
        %v1318 = vsel %vm694, %v1062, 0.0
        %v1319 = vsel %vm694, %v1077, 0.0
        %v1320 = vsel %vm694, %v1092, 0.0
        %v1321 = vsel %vm694, %v1107, 0.0
        %v1322 = vsel %vm694, %v1122, 0.0
        %v1323 = vsel %vm694, %v1137, 0.0
        %v1324 = vsel %vm694, %v1152, 0.0
        %v1325 = vsel %vm694, %v1167, 0.0
        %v1326 = vsel %vm694, %v1182, 0.0
        %v1327 = vsel %vm694, %v1197, 0.0
        %v1328 = vsel %vm694, %v1212, 0.0
        %v1329 = vsel %vm694, %v1227, 0.0
        %v1330 = vsel %vm694, %v1242, 0.0
        %v1331 = vsel %vm694, %v1257, 0.0
        %v1332 = vsel %vm694, %v1272, 0.0
        %v1333 = vsel %vm694, %v1287, 0.0
        %v1334 = vsel %vm694, %v1302, 0.0
        %v1335 = vsel %vm693, %v612, %v1303
        %v1336 = vsel %vm693, %v614, %v1304
        %v1337 = vsel %vm693, %v617, %v1305
        %v1338 = vsel %vm693, %v619, %v1306
        %v1339 = vsel %vm693, %v622, %v1307
        %v1340 = vsel %vm693, %v624, %v1308
        %v1341 = vsel %vm693, %v627, %v1309
        %v1342 = vsel %vm693, %v629, %v1310
        %v1343 = vsel %vm693, %v632, %v1311
        %v1344 = vsel %vm693, %v634, %v1312
        %v1345 = vsel %vm693, %v637, %v1313
        %v1346 = vsel %vm693, %v639, %v1314
        %v1347 = vsel %vm693, %v642, %v1315
        %v1348 = vsel %vm693, %v644, %v1316
        %v1349 = vsel %vm693, %v647, %v1317
        %v1350 = vsel %vm693, %v649, %v1318
        %v1351 = vsel %vm693, %v652, %v1319
        %v1352 = vsel %vm693, %v654, %v1320
        %v1353 = vsel %vm693, %v657, %v1321
        %v1354 = vsel %vm693, %v659, %v1322
        %v1355 = vsel %vm693, %v662, %v1323
        %v1356 = vsel %vm693, %v664, %v1324
        %v1357 = vsel %vm693, %v667, %v1325
        %v1358 = vsel %vm693, %v669, %v1326
        %v1359 = vsel %vm693, %v672, %v1327
        %v1360 = vsel %vm693, %v674, %v1328
        %v1361 = vsel %vm693, %v677, %v1329
        %v1362 = vsel %vm693, %v679, %v1330
        %v1363 = vsel %vm693, %v682, %v1331
        %v1364 = vsel %vm693, %v684, %v1332
        %v1365 = vsel %vm693, %v687, %v1333
        %v1366 = vsel %vm693, %v689, %v1334
        %1367 = vst [vmem:[%s218] sm:$0xff] %v1335
        %1368 = vst [vmem:[%s218 + $0x8] sm:$0xff] %v1336
        %1369 = vst [vmem:[%s218 + $0x10] sm:$0xff] %v1337
        %1370 = vst [vmem:[%s218 + $0x18] sm:$0xff] %v1338
        %1371 = vst [vmem:[%s218 + $0x20] sm:$0xff] %v1339
        %1372 = vst [vmem:[%s218 + $0x28] sm:$0xff] %v1340
        %1373 = vst [vmem:[%s218 + $0x30] sm:$0xff] %v1341
        %1374 = vst [vmem:[%s218 + $0x38] sm:$0xff] %v1342
        %1375 = vst [vmem:[%s218 + $0x40] sm:$0xff] %v1343
        %1376 = vst [vmem:[%s218 + $0x48] sm:$0xff] %v1344
        %1377 = vst [vmem:[%s218 + $0x50] sm:$0xff] %v1345
        %1378 = vst [vmem:[%s218 + $0x58] sm:$0xff] %v1346
        %1379 = vst [vmem:[%s218 + $0x60] sm:$0xff] %v1347
        %1380 = vst [vmem:[%s218 + $0x68] sm:$0xff] %v1348
        %1381 = vst [vmem:[%s218 + $0x70] sm:$0xff] %v1349
        %1382 = vst [vmem:[%s218 + $0x78] sm:$0xff] %v1350
        %1383 = vst [vmem:[%s218 + $0x80] sm:$0xff] %v1351
        %1384 = vst [vmem:[%s218 + $0x88] sm:$0xff] %v1352
        %1385 = vst [vmem:[%s218 + $0x90] sm:$0xff] %v1353
        %1386 = vst [vmem:[%s218 + $0x98] sm:$0xff] %v1354
        %1387 = vst [vmem:[%s218 + $0xa0] sm:$0xff] %v1355
        %1388 = vst [vmem:[%s218 + $0xa8] sm:$0xff] %v1356
        %1389 = vst [vmem:[%s218 + $0xb0] sm:$0xff] %v1357
        %1390 = vst [vmem:[%s218 + $0xb8] sm:$0xff] %v1358
        %1391 = vst [vmem:[%s218 + $0xc0] sm:$0xff] %v1359
        %1392 = vst [vmem:[%s218 + $0xc8] sm:$0xff] %v1360
        %1393 = vst [vmem:[%s218 + $0xd0] sm:$0xff] %v1361
        %1394 = vst [vmem:[%s218 + $0xd8] sm:$0xff] %v1362
        %1395 = vst [vmem:[%s218 + $0xe0] sm:$0xff] %v1363
        %1396 = vst [vmem:[%s218 + $0xe8] sm:$0xff] %v1364
        %1397 = vst [vmem:[%s218 + $0xf0] sm:$0xff] %v1365
        %1398 = vst [vmem:[%s218 + $0xf8] sm:$0xff] %v1366
        %s1399 = sand.u32 %s137, 1
        %s1400 = scalar_lea.sflag [#allocation3], %s1399
        %s1401 = sand.u32 %s137, 1
        %s1402 = smul.addr %s1401, 256
        %s1403 = scalar_lea.vmem [#allocation2], %s1402
        // Predicated region
        $region41: #{tpu_custom_call.1} parent=39 // pred_check
          %p1404 = pneg %p147
        $region42: #{tpu_custom_call.1} parent=39 // pred_check_branch
          %1406 = sbr.rel (%p1404) target = $region44
        $region43: #{tpu_custom_call.1} parent=39 // pred_region
          %s1407 = smul.u32 32, %s19
          %1409 = vsyncadd %s1400, 0
          %s1410 = smul.addr %s1407, 8
          %s1411 = scalar_lea.hbm %s5, %s1410
          %s1412 = sshll.u32 %s1403, 4
          %s1413 = int_to_ptr.vmem [resolvable:$true] %s1412
          %s1414 = sshll.u32 %s1411, 4
          %s1415 = int_to_ptr.hbm [resolvable:$true] %s1414
          %1420 = dma.vmem_to_hbm [thread:$0]  %s1413, 4096, %s1415, %s1400, 128, 128, 8
        $region44: #{tpu_custom_call.1} parent=39 // pred_fallthru
          _
      $region40: #{tpu_custom_call.1} parent=5 // pred_fallthru
        _
      %p1421 = scmp.le.s32.totalorder 2, %s14
      // Predicated region
      $region45: #{tpu_custom_call.1} parent=5 // pred_check
        %p1422 = pneg %p1421
      $region46: #{tpu_custom_call.1} parent=5 // pred_check_branch
        %1424 = sbr.rel (%p1422) target = $region48
      $region47: #{tpu_custom_call.1} parent=5 // pred_region
        %s1425 = ssub.s32 %s14, 2
        // Predicated region
        $region49: #{tpu_custom_call.1} parent=47 // pred_check
          %p1426 = pneg %p153
        $region50: #{tpu_custom_call.1} parent=47 // pred_check_branch
          %1428 = sbr.rel (%p1426) target = $region52
        $region51: #{tpu_custom_call.1} parent=47 // pred_region
          %s1429 = sand.u32 %s138, 1
          %s1430 = scalar_lea.sflag [#allocation3], %s1429
          %s1431 = sand.u32 %s138, 1
          %s1432 = smul.addr %s1431, 256
          %s1433 = scalar_lea.vmem [#allocation2], %s1432
          %1435 = dma.done %s1430, 4096
        $region52: #{tpu_custom_call.1} parent=47 // pred_fallthru
          _
      $region48: #{tpu_custom_call.1} parent=5 // pred_fallthru
        _
    $region6: #{tpu_custom_call.1} parent=1 // loop_footer
      %s18 = sadd.s32 1, %s14
    $region7: #{tpu_custom_call.1} parent=1 // loop_footer_branch
      %13 = sbr.rel target = $region3
    $region8: #{tpu_custom_call.1} parent=1 // loop_exit
      _
    %1436 = vsyncpa [#allocation3], 1
    %s1437 = scalar_lea.sflag [#allocation3], 1
    %1438 = vsyncpa %s1437, 1

</llo_original>
